<compile_context>
chip_gen: v6e
topology: v6e:2x2x1
jax: 0.10.0
libtpu: 0.0.40
codegen_flags: <defaults>
</compile_context>

<pallas_src>
import functools

import jax
import jax.numpy as jnp
from jax import lax
from jax.experimental import pallas as pl
from jax.experimental.pallas import tpu as pltpu

EPSILON = 1e-10


def _round_up(x, m):
    return ((x + m - 1) // m) * m


def _focal_kernel(x_ref, t_ref, alpha_ref, f_ref, a_ref, *,
                  gamma, num_class, n_valid, sub_per_block, needs_mask):
    # x_ref:     (1, C, S, 128)  logits chunk; rows packed as sublane-groups x lanes
    # t_ref:     (1, S, 128)     int32 targets chunk
    # alpha_ref: (C,)            normalized class weights (SMEM scalar table)
    # f_ref:     (1, 1, 1, 1)    per-(batch, chunk) sum of -(1-pt)^gamma*log(pt)
    # a_ref:     (1, 1, 1, 1)    per-(batch, chunk) sum of alpha[target]
    j = pl.program_id(1)

    x = x_ref[...].astype(jnp.float32)               # (1, C, S, 128)
    t = t_ref[...][:, None, :, :]                    # (1, 1, S, 128)

    # Numerically stable softmax pieces.  The class axis is a leading (non
    # vreg) dim, so max/sum are C-1 elementwise VPU ops over packed planes.
    m = jnp.max(x, axis=1, keepdims=True)            # (1, 1, S, 128)
    e = jnp.exp(x - m)                               # (1, C, S, 128)
    s = jnp.sum(e, axis=1, keepdims=True)            # (1, 1, S, 128)

    # Select e[target] and alpha[target] with a short per-class select chain
    # (C-1 compares + 2*(C-1) selects on packed vregs; no one-hot matrix).
    e_t = e[:, 0:1]
    a_g = jnp.full(t.shape, alpha_ref[0], jnp.float32)
    for ci in range(1, num_class):
        sel = t == ci
        e_t = jnp.where(sel, e[:, ci:ci + 1], e_t)
        a_g = jnp.where(sel, alpha_ref[ci], a_g)

    # pt = softmax(x)[target] = e[target] / sum(e)  (one divide per row-vreg).
    pt = e_t / s + EPSILON
    logpt = jnp.log(pt)

    one_minus = 1.0 - pt
    g = float(gamma)
    if g == 2.0:
        fw = one_minus * one_minus                   # single VPU multiply
    elif g == float(int(g)) and g >= 0.0:
        fw = lax.integer_pow(one_minus, int(g))
    else:
        fw = one_minus ** g
    f = -fw * logpt                                  # (1, 1, S, 128)

    # Mask padded rows and the out-of-bounds tail of a partial last chunk.
    # (Only traced when the row count is not chunk-aligned.)
    if needs_mask:
        grp = lax.broadcasted_iota(jnp.int32, f.shape, 2)
        lane = lax.broadcasted_iota(jnp.int32, f.shape, 3)
        row = (j * sub_per_block + grp) * 128 + lane
        valid = row < n_valid
        f = jnp.where(valid, f, 0.0)
        a_g = jnp.where(valid, a_g, 0.0)

    # Per-chunk partial sums (each grid step owns its own output block, so
    # both grid axes stay "parallel"; lane reduce is amortized by big tiles).
    f_ref[...] = jnp.sum(f, axis=(1, 2, 3), keepdims=True)
    a_ref[...] = jnp.sum(a_g, axis=(1, 2, 3), keepdims=True)


def focal_loss(x, target, alpha, *, gamma=2, size_average=True,
               max_rows_per_block=32768):
    """Focal loss matching the PyTorch module forward (smooth=None).

    x: [B, C, ...] logits (softmax over axis 1), or 2-D [N, C] logits.
       May be f32 or bf16 (bf16 is upcast to f32 inside the kernel).
    target: integer class ids with prod(non-class dims) elements.
    alpha: [C] class weights (normalized internally, like the module).
    """
    # TODO(synk): smooth-label clamping of the one-hot (module's `smooth`
    # option) is not implemented; the module default (smooth=None) is covered.
    x = jnp.asarray(x)
    target = jnp.asarray(target)

    if x.ndim > 2:
        b, c = x.shape[0], x.shape[1]
        xcm = x.reshape(b, c, -1)                    # class-major, zero-copy
        hw = xcm.shape[-1]
        t2 = target.reshape(b, hw).astype(jnp.int32)
    else:
        # 2-D fallback: one transpose to class-major.
        n, c = x.shape
        b, hw = 1, n
        xcm = x.T.reshape(1, c, n)
        t2 = target.reshape(1, n).astype(jnp.int32)

    alpha = jnp.asarray(alpha, jnp.float32).reshape(-1)
    alpha = alpha / jnp.sum(alpha)                   # (C,) SMEM scalar table

    # Pack rows onto (sublane-group, lane).  Pad to a multiple of 128 only
    # when needed (the only case that costs one extra HBM copy); the reshape
    # [B, C, hwp] -> [B, C, hwp//128, 128] itself is zero-copy.
    hwp = _round_up(hw, 128)
    if hwp != hw:
        # TODO(synk): for non-128-aligned H*W this pad materializes one copy
        # of the logits; 128-aligned sizes take the zero-copy path.
        xcm = jnp.pad(xcm, ((0, 0), (0, 0), (0, hwp - hw)))
        t2 = jnp.pad(t2, ((0, 0), (0, hwp - hw)))
    r128 = hwp // 128
    xp = xcm.reshape(b, c, r128, 128)
    tp = t2.reshape(b, r128, 128)

    # Row chunk: up to max_rows_per_block rows per grid step.  The sublane
    # extent is a multiple of 8 when it does not cover the full row-group
    # axis; a partial last chunk is handled by the in-kernel mask (no pad to
    # the tile size).
    sub_target = max(8, (max_rows_per_block // 128) // 8 * 8)
    if r128 <= sub_target:
        sub = r128
        num_chunks = 1
    else:
        sub = sub_target
        num_chunks = pl.cdiv(r128, sub)
    rows_per_chunk = sub * 128
    needs_mask = (num_chunks * rows_per_chunk) != hw

    n_rows = b * hw
    kernel = functools.partial(
        _focal_kernel, gamma=gamma, num_class=c, n_valid=hw,
        sub_per_block=sub, needs_mask=needs_mask)

    cost = pl.CostEstimate(
        flops=int(n_rows * (3 * c + 14)),
        transcendentals=int(n_rows * (c + 1)),
        bytes_accessed=int(xp.size * xp.dtype.itemsize + tp.size * 4
                           + 2 * b * num_chunks * 4 + c * 4),
    )

    f_part, a_part = pl.pallas_call(
        kernel,
        out_shape=(
            jax.ShapeDtypeStruct((b, num_chunks, 1, 1), jnp.float32),
            jax.ShapeDtypeStruct((b, num_chunks, 1, 1), jnp.float32),
        ),
        grid_spec=pltpu.PrefetchScalarGridSpec(
            num_scalar_prefetch=0,
            grid=(b, num_chunks),
            in_specs=[
                pl.BlockSpec((1, c, sub, 128), lambda i, j: (i, 0, j, 0)),  # logits
                pl.BlockSpec((1, sub, 128), lambda i, j: (i, j, 0)),        # targets
                pl.BlockSpec(memory_space=pltpu.MemorySpace.SMEM),          # alpha
            ],
            out_specs=[
                pl.BlockSpec((1, 1, 1, 1), lambda i, j: (i, j, 0, 0)),
                pl.BlockSpec((1, 1, 1, 1), lambda i, j: (i, j, 0, 0)),
            ],
        ),
        compiler_params=pltpu.CompilerParams(
            dimension_semantics=("parallel", "parallel"),
        ),
        cost_estimate=cost,
    )(xp, tp, alpha)

    sum_f = jnp.sum(f_part)
    sum_a = jnp.sum(a_part)
    # PyTorch broadcast quirk: loss[i, 0, j] = alpha[target[i]] * f[j], so the
    # reduction factorizes exactly.
    if size_average:
        n_f = jnp.float32(n_rows)
        return (sum_a / n_f) * (sum_f / n_f)
    return sum_a * sum_f


def _focal_loss_ref(x, target, alpha, gamma=2, size_average=True):
    # Pure-JAX reference mirroring the PyTorch forward (incl. broadcast quirk).
    b, c = x.shape[0], x.shape[1]
    logit = jax.nn.softmax(x.astype(jnp.float32), axis=1)
    logit = logit.reshape(b, c, -1).transpose(0, 2, 1).reshape(-1, c)
    t = target.reshape(-1).astype(jnp.int32)
    alpha = jnp.asarray(alpha, jnp.float32).reshape(-1)
    alpha = alpha / jnp.sum(alpha)
    one_hot = jax.nn.one_hot(t, c, dtype=jnp.float32)
    pt = jnp.sum(one_hot * logit, axis=1) + EPSILON
    logpt = jnp.log(pt)
    a_g = alpha[t][:, None, None]                        # (N, 1, 1)
    loss = -1.0 * a_g * ((1.0 - pt) ** gamma) * logpt    # (N, 1, N)
    return jnp.mean(loss) if size_average else jnp.sum(loss)


if __name__ == "__main__":
    num_class = 5
    alpha = jnp.array([0.1825, 0.15, 0.235, 0.2375, 0.195], jnp.float32)

    key = jax.random.PRNGKey(0)
    kx, kt = jax.random.split(key)

    # Primary: lane-aligned spatial size (zero-copy packed path).
    B, C, H, W = 2, num_class, 16, 16
    x = jax.random.normal(kx, (B, C, H, W), jnp.float32)
    target = jax.random.randint(kt, (B, H, W), 0, num_class, jnp.int32)
    loss = jax.block_until_ready(focal_loss(x, target, alpha, gamma=2, size_average=True))
    ref = _focal_loss_ref(x, target, alpha, gamma=2, size_average=True)
    assert jnp.allclose(loss, ref, rtol=1e-4, atol=1e-6), (loss, ref)

    # bf16 logits: DMA'd as bf16, upcast to f32 inside the kernel.
    x_bf16 = x.astype(jnp.bfloat16)
    loss_bf = jax.block_until_ready(focal_loss(x_bf16, target, alpha))
    ref_bf = _focal_loss_ref(x_bf16, target, alpha)
    assert jnp.allclose(loss_bf, ref_bf, rtol=1e-4, atol=1e-6), (loss_bf, ref_bf)

    # Non-128-aligned spatial size (pad + in-kernel row mask) and sum mode.
    H2 = W2 = 10
    x2 = jax.random.normal(kx, (B, C, H2, W2), jnp.float32)
    t2 = jax.random.randint(kt, (B, H2, W2), 0, num_class, jnp.int32)
    loss2 = jax.block_until_ready(focal_loss(x2, t2, alpha, gamma=2, size_average=False))
    ref2 = _focal_loss_ref(x2, t2, alpha, gamma=2, size_average=False)
    assert jnp.allclose(loss2, ref2, rtol=1e-4, atol=1e-6), (loss2, ref2)

    # Multi-chunk grid with a partial last chunk: 36*36 = 1296 rows -> 11
    # row-groups, chunks of 8 groups (small block size keeps the test tiny
    # while exercising the cdiv grid + out-of-bounds masking path).
    H3 = W3 = 36
    x3 = jax.random.normal(kx, (1, C, H3, W3), jnp.float32)
    t3 = jax.random.randint(kt, (1, H3, W3), 0, num_class, jnp.int32)
    loss3 = jax.block_until_ready(focal_loss(x3, t3, alpha, max_rows_per_block=1024))
    ref3 = _focal_loss_ref(x3, t3, alpha)
    assert jnp.allclose(loss3, ref3, rtol=1e-3, atol=1e-6), (loss3, ref3)

    print("KERNEL_OK")
</pallas_src>

<mosaic_0001>
module attributes {stable_mosaic.version = 11 : i64} {
  func.func @_focal_kernel(%arg0: i32, %arg1: i32, %arg2: memref<1x5x2x128xf32, #tpu.memory_space<vmem>>, %arg3: memref<1x2x128xi32, #tpu.memory_space<vmem>>, %arg4: memref<5xf32, #tpu.memory_space<smem>>, %arg5: memref<1x1x1x1xf32, #tpu.memory_space<vmem>>, %arg6: memref<1x1x1x1xf32, #tpu.memory_space<vmem>>) attributes {dimension_semantics = [#tpu.dimension_semantics<parallel>, #tpu.dimension_semantics<parallel>], iteration_bounds = array<i64: 2, 1>, scalar_prefetch = 0 : i64, scratch_operands = 0 : i64, tpu.core_type = #tpu.core_type<tc>, window_params = [{transform_indices = @transform_0, window_bounds = array<i64: 1, 5, 2, 128>}, {transform_indices = @transform_1, window_bounds = array<i64: 1, 2, 128>}, {transform_indices = @transform_2, window_bounds = array<i64: 5>}, {transform_indices = @transform_3, window_bounds = array<i64: 1, 1, 1, 1>}, {transform_indices = @transform_4, window_bounds = array<i64: 1, 1, 1, 1>}]} {
    %c0 = arith.constant 0 : index
    %c0_0 = arith.constant 0 : index
    %c0_1 = arith.constant 0 : index
    %c0_2 = arith.constant 0 : index
    %0 = vector.load %arg2[%c0, %c0_0, %c0_1, %c0_2] : memref<1x5x2x128xf32, #tpu.memory_space<vmem>>, vector<1x5x2x128xf32>
    %c0_3 = arith.constant 0 : index
    %c0_4 = arith.constant 0 : index
    %c0_5 = arith.constant 0 : index
    %1 = vector.load %arg3[%c0_3, %c0_4, %c0_5] : memref<1x2x128xi32, #tpu.memory_space<vmem>>, vector<1x2x128xi32>
    %2 = vector.shape_cast %1 : vector<1x2x128xi32> to vector<1x1x2x128xi32>
    %cst = arith.constant dense<0xFF800000> : vector<1x2x128xf32>
    %3 = vector.multi_reduction <maximumf>, %0, %cst [1] : vector<1x5x2x128xf32> to vector<1x2x128xf32>
    %4 = vector.shape_cast %3 : vector<1x2x128xf32> to vector<1x1x2x128xf32>
    %5 = vector.broadcast %4 : vector<1x1x2x128xf32> to vector<1x5x2x128xf32>
    %6 = arith.subf %0, %5 : vector<1x5x2x128xf32>
    %7 = math.exp %6 : vector<1x5x2x128xf32>
    %cst_6 = arith.constant dense<0.000000e+00> : vector<1x2x128xf32>
    %8 = vector.multi_reduction <add>, %7, %cst_6 [1] : vector<1x5x2x128xf32> to vector<1x2x128xf32>
    %9 = vector.shape_cast %8 : vector<1x2x128xf32> to vector<1x1x2x128xf32>
    %10 = vector.extract_strided_slice %7 {offsets = [0, 0, 0, 0], sizes = [1, 1, 2, 128], strides = [1, 1, 1, 1]} : vector<1x5x2x128xf32> to vector<1x1x2x128xf32>
    %c0_7 = arith.constant 0 : index
    %11 = memref.load %arg4[%c0_7] : memref<5xf32, #tpu.memory_space<smem>>
    %12 = vector.broadcast %11 : f32 to vector<1x1x2x128xf32>
    %c1_i32 = arith.constant 1 : i32
    %13 = vector.broadcast %c1_i32 : i32 to vector<1x1x2x128xi32>
    %14 = arith.cmpi eq, %2, %13 : vector<1x1x2x128xi32>
    %15 = vector.extract_strided_slice %7 {offsets = [0, 1, 0, 0], sizes = [1, 1, 2, 128], strides = [1, 1, 1, 1]} : vector<1x5x2x128xf32> to vector<1x1x2x128xf32>
    %16 = arith.select %14, %15, %10 : vector<1x1x2x128xi1>, vector<1x1x2x128xf32>
    %c1 = arith.constant 1 : index
    %17 = memref.load %arg4[%c1] : memref<5xf32, #tpu.memory_space<smem>>
    %18 = vector.broadcast %17 : f32 to vector<1x1x2x128xf32>
    %19 = arith.select %14, %18, %12 : vector<1x1x2x128xi1>, vector<1x1x2x128xf32>
    %c2_i32 = arith.constant 2 : i32
    %20 = vector.broadcast %c2_i32 : i32 to vector<1x1x2x128xi32>
    %21 = arith.cmpi eq, %2, %20 : vector<1x1x2x128xi32>
    %22 = vector.extract_strided_slice %7 {offsets = [0, 2, 0, 0], sizes = [1, 1, 2, 128], strides = [1, 1, 1, 1]} : vector<1x5x2x128xf32> to vector<1x1x2x128xf32>
    %23 = arith.select %21, %22, %16 : vector<1x1x2x128xi1>, vector<1x1x2x128xf32>
    %c2 = arith.constant 2 : index
    %24 = memref.load %arg4[%c2] : memref<5xf32, #tpu.memory_space<smem>>
    %25 = vector.broadcast %24 : f32 to vector<1x1x2x128xf32>
    %26 = arith.select %21, %25, %19 : vector<1x1x2x128xi1>, vector<1x1x2x128xf32>
    %c3_i32 = arith.constant 3 : i32
    %27 = vector.broadcast %c3_i32 : i32 to vector<1x1x2x128xi32>
    %28 = arith.cmpi eq, %2, %27 : vector<1x1x2x128xi32>
    %29 = vector.extract_strided_slice %7 {offsets = [0, 3, 0, 0], sizes = [1, 1, 2, 128], strides = [1, 1, 1, 1]} : vector<1x5x2x128xf32> to vector<1x1x2x128xf32>
    %30 = arith.select %28, %29, %23 : vector<1x1x2x128xi1>, vector<1x1x2x128xf32>
    %c3 = arith.constant 3 : index
    %31 = memref.load %arg4[%c3] : memref<5xf32, #tpu.memory_space<smem>>
    %32 = vector.broadcast %31 : f32 to vector<1x1x2x128xf32>
    %33 = arith.select %28, %32, %26 : vector<1x1x2x128xi1>, vector<1x1x2x128xf32>
    %c4_i32 = arith.constant 4 : i32
    %34 = vector.broadcast %c4_i32 : i32 to vector<1x1x2x128xi32>
    %35 = arith.cmpi eq, %2, %34 : vector<1x1x2x128xi32>
    %36 = vector.extract_strided_slice %7 {offsets = [0, 4, 0, 0], sizes = [1, 1, 2, 128], strides = [1, 1, 1, 1]} : vector<1x5x2x128xf32> to vector<1x1x2x128xf32>
    %37 = arith.select %35, %36, %30 : vector<1x1x2x128xi1>, vector<1x1x2x128xf32>
    %c4 = arith.constant 4 : index
    %38 = memref.load %arg4[%c4] : memref<5xf32, #tpu.memory_space<smem>>
    %39 = vector.broadcast %38 : f32 to vector<1x1x2x128xf32>
    %40 = arith.select %35, %39, %33 : vector<1x1x2x128xi1>, vector<1x1x2x128xf32>
    %41 = arith.divf %37, %9 : vector<1x1x2x128xf32>
    %cst_8 = arith.constant 1.000000e-10 : f32
    %42 = vector.broadcast %cst_8 : f32 to vector<1x1x2x128xf32>
    %43 = arith.addf %41, %42 : vector<1x1x2x128xf32>
    %44 = math.log %43 : vector<1x1x2x128xf32>
    %cst_9 = arith.constant 1.000000e+00 : f32
    %45 = vector.broadcast %cst_9 : f32 to vector<1x1x2x128xf32>
    %46 = arith.subf %45, %43 : vector<1x1x2x128xf32>
    %47 = arith.mulf %46, %46 : vector<1x1x2x128xf32>
    %cst_10 = arith.constant 0.000000e+00 : f32
    %48 = vector.broadcast %cst_10 : f32 to vector<1x1x2x128xf32>
    %49 = arith.subf %48, %47 : vector<1x1x2x128xf32>
    %50 = arith.mulf %49, %44 : vector<1x1x2x128xf32>
    %cst_11 = arith.constant dense<0.000000e+00> : vector<1xf32>
    %51 = vector.multi_reduction <add>, %50, %cst_11 [1, 2, 3] : vector<1x1x2x128xf32> to vector<1xf32>
    %52 = vector.shape_cast %51 : vector<1xf32> to vector<1x1x1x1xf32>
    %c0_12 = arith.constant 0 : index
    %c0_13 = arith.constant 0 : index
    %c0_14 = arith.constant 0 : index
    %c0_15 = arith.constant 0 : index
    %53 = vector.load %arg5[%c0_12, %c0_13, %c0_14, %c0_15] : memref<1x1x1x1xf32, #tpu.memory_space<vmem>>, vector<1x1x1x1xf32>
    tpu.vector_store %arg5[%c0_12, %c0_13, %c0_14, %c0_15], %52 {strides = array<i32>} : memref<1x1x1x1xf32, #tpu.memory_space<vmem>>, vector<1x1x1x1xf32>,
    %cst_16 = arith.constant dense<0.000000e+00> : vector<1xf32>
    %54 = vector.multi_reduction <add>, %40, %cst_16 [1, 2, 3] : vector<1x1x2x128xf32> to vector<1xf32>
    %55 = vector.shape_cast %54 : vector<1xf32> to vector<1x1x1x1xf32>
    %c0_17 = arith.constant 0 : index
    %c0_18 = arith.constant 0 : index
    %c0_19 = arith.constant 0 : index
    %c0_20 = arith.constant 0 : index
    %56 = vector.load %arg6[%c0_17, %c0_18, %c0_19, %c0_20] : memref<1x1x1x1xf32, #tpu.memory_space<vmem>>, vector<1x1x1x1xf32>
    tpu.vector_store %arg6[%c0_17, %c0_18, %c0_19, %c0_20], %55 {strides = array<i32>} : memref<1x1x1x1xf32, #tpu.memory_space<vmem>>, vector<1x1x1x1xf32>,
    return
  }
  func.func @transform_0(%arg0: i32, %arg1: i32) -> (i32, i32, i32, i32) {
    %c0_i32 = arith.constant 0 : i32
    %c0_i32_0 = arith.constant 0 : i32
    %c0_i32_1 = arith.constant 0 : i32
    return %arg0, %c0_i32, %arg1, %c0_i32_0 : i32, i32, i32, i32
  }
  func.func @transform_1(%arg0: i32, %arg1: i32) -> (i32, i32, i32) {
    %c0_i32 = arith.constant 0 : i32
    %c0_i32_0 = arith.constant 0 : i32
    return %arg0, %arg1, %c0_i32 : i32, i32, i32
  }
  func.func @transform_2(%arg0: i32, %arg1: i32) -> i32 {
    %c0_i32 = arith.constant 0 : i32
    %c0_i32_0 = arith.constant 0 : i32
    return %c0_i32 : i32
  }
  func.func @transform_3(%arg0: i32, %arg1: i32) -> (i32, i32, i32, i32) {
    %c0_i32 = arith.constant 0 : i32
    %c0_i32_0 = arith.constant 0 : i32
    %c0_i32_1 = arith.constant 0 : i32
    return %arg0, %arg1, %c0_i32, %c0_i32_0 : i32, i32, i32, i32
  }
  func.func @transform_4(%arg0: i32, %arg1: i32) -> (i32, i32, i32, i32) {
    %c0_i32 = arith.constant 0 : i32
    %c0_i32_0 = arith.constant 0 : i32
    %c0_i32_1 = arith.constant 0 : i32
    return %arg0, %arg1, %c0_i32, %c0_i32_0 : i32, i32, i32, i32
  }
}

</mosaic_0001>

<llo_original>
// kernel: tpu_custom_call.1
$region0: #{tpu_custom_call.1}
  #allocation0 [shape = 'u32[]', space=smem, size = 0x4, offset = 0x4, fixed_abs, tag = 'smem constant byte address 0x4 - core index']
  #allocation1 [shape = 'u32[144,128]{1,0:T(1,128)}', space=vmem, size = 0x12000, scoped, tag = 'internal scratch']
  %s0 = inlined_call_operand.hbm [shape: f32[2,5,2,128], index: 0, kind: input, shape index: {}]
  %s1 = inlined_call_operand.hbm [shape: s32[2,2,128], index: 1, kind: input, shape index: {}]
  %s2 = inlined_call_operand.vmem [shape: f32[5], index: 2, kind: input, shape index: {}]
  %s3 = inlined_call_operand.vmem [shape: f32[2,1,1,1], index: 3, kind: output, shape index: {0}]
  %s4 = inlined_call_operand.vmem [shape: f32[2,1,1,1], index: 4, kind: output, shape index: {1}]
  %5 = xla_tuple %s3, %s4
  %s6 = sld [smem:[#allocation0]]
  $region65: #{tpu_custom_call.1} parent=0
    _
  %s8 = ssub.s32 1, %s6
  %s9 = scalar_select 0, %s8, %s6
  $region1: #{tpu_custom_call.1} parent=0
    #allocation2 [shape = 'u8[10240]{0}', space=vmem, size = 0x2800, scoped, tag = 'input window, operand 0']
    #allocation3 [shape = 's32[2]{0}', space=sflag, size = 0x8, scoped, tag = 'scoped memory for tpu_custom_call.1']
    #allocation4 [shape = 's32[2]{0}', space=sflag, size = 0x8, scoped, tag = 'scoped memory for tpu_custom_call.1']
    #allocation5 [shape = 'u8[2048]{0}', space=vmem, size = 0x800, scoped, tag = 'input window, operand 1']
    #allocation6 [shape = 's32[2]{0}', space=sflag, size = 0x8, scoped, tag = 'scoped memory for tpu_custom_call.1']
    #allocation7 [shape = 'u8[512]{0}', space=smem, size = 0x200, scoped, tag = 'input window, operand 2, single buffered']
    %10 = vsyncpa [#allocation3], 0
    %s11 = scalar_lea.sflag [#allocation3], 1
    %12 = vsyncpa %s11, 0
    %13 = vsyncpa [#allocation6], 0
    %s14 = scalar_lea.sflag [#allocation6], 1
    %15 = vsyncpa %s14, 0
    %16 = vsyncpa [#allocation4], 0
    loop: start=0, step=1, limit=4
    $region2: #{tpu_custom_call.1} parent=1 // loop_pre_header
      _
    $region3: #{tpu_custom_call.1} parent=1 // loop_header
      %s18 = sphi 0, %s22
      %p19 = scmp.ge.s32.totalorder %s18, 4
      %s25 = sphi 0, %s37
      %s26 = sphi 0, %s33
      %s27 = sphi 0, %s25
      %s28 = sphi 0, %s26
      %s29 = sphi 0, %s27
      %s30 = sphi 0, %s28
      %s42 = sphi 0, %s44
      %s45 = sphi 0, %s42
      %s46 = sphi 0, %s45
      %s62 = sphi 0, %s46
      %s70 = sphi 0, %s72
      %s73 = sphi 0, %s70
      %s74 = sphi 0, %s73
      %s90 = sphi 0, %s74
      %s94 = sphi 0, %s94
      %s96 = sphi 0, %s94
      %s97 = sphi 0, %s96
      %s111 = sphi 0, %s97
      %s119 = sphi 0, %s121
      %s122 = sphi 0, %s119
      %s123 = sphi 0, %s122
      %s139 = sphi 0, %s123
      %s147 = sphi 0, %s149
      %s150 = sphi 0, %s147
      %s151 = sphi 0, %s150
      %s167 = sphi 0, %s151
    $region4: #{tpu_custom_call.1} parent=1 // loop_header_branch
      %21 = sbr.rel (%p19) target = $region8
    $region5: #{tpu_custom_call.1} parent=1 // loop_body
      %s23 = ssub.s32 %s18, 1
      %s24 = ssub.s32 %s18, 2
      %s31 = sadd.s32 1, %s26
      %p32 = scmp.ge.s32.totalorder %s31, 1
      %s33 = scalar_select %p32, 0, %s31
      %s34 = sadd.s32 1, %s25
      %s35 = scalar_select %p32, %s34, %s25
      %p36 = scmp.ge.s32.totalorder %s35, 2
      %s37 = scalar_select %p36, 0, %s35
      %s38 = ssub.s32 %s25, %s37
      %s39 = ssub.s32 %s26, %s33
      %s40 = sor.u32 %s38, %s39
      %p41 = scmp.eq.s32.totalorder %s40, 0
      %s43 = sadd.s32 %s42, 1
      %s44 = scalar_select %p41, %s42, %s43
      %p47 = pneg %p41
      %p48 = scmp.eq.s32.totalorder %s18, 1
      %p49 = por %p47, %p48
      %p50 = scmp.ne.s32.totalorder %s42, %s45
      %p51 = scmp.eq.s32.totalorder %s18, 0
      %p52 = por %p50, %p51
      %p53 = scmp.ne.s32.totalorder %s42, %s45
      %p54 = scmp.eq.s32.totalorder %s23, 1
      %p55 = por %p53, %p54
      %p56 = scmp.ne.s32.totalorder %s45, %s46
      %p57 = scmp.eq.s32.totalorder %s23, 0
      %p58 = por %p56, %p57
      %p59 = scmp.ne.s32.totalorder %s45, %s46
      %p60 = scmp.eq.s32.totalorder %s24, 1
      %p61 = por %p59, %p60
      %p63 = scmp.ne.s32.totalorder %s46, %s62
      %p64 = scmp.eq.s32.totalorder %s24, 0
      %p65 = por %p63, %p64
      %s66 = ssub.s32 %s25, %s37
      %s67 = ssub.s32 %s26, %s33
      %s68 = sor.u32 %s66, %s67
      %p69 = scmp.eq.s32.totalorder %s68, 0
      %s71 = sadd.s32 %s70, 1
      %s72 = scalar_select %p69, %s70, %s71
      %p75 = pneg %p69
      %p76 = scmp.eq.s32.totalorder %s18, 1
      %p77 = por %p75, %p76
      %p78 = scmp.ne.s32.totalorder %s70, %s73
      %p79 = scmp.eq.s32.totalorder %s18, 0
      %p80 = por %p78, %p79
      %p81 = scmp.ne.s32.totalorder %s70, %s73
      %p82 = scmp.eq.s32.totalorder %s23, 1
      %p83 = por %p81, %p82
      %p84 = scmp.ne.s32.totalorder %s73, %s74
      %p85 = scmp.eq.s32.totalorder %s23, 0
      %p86 = por %p84, %p85
      %p87 = scmp.ne.s32.totalorder %s73, %s74
      %p88 = scmp.eq.s32.totalorder %s24, 1
      %p89 = por %p87, %p88
      %p91 = scmp.ne.s32.totalorder %s74, %s90
      %p92 = scmp.eq.s32.totalorder %s24, 0
      %p93 = por %p91, %p92
      %s95 = sadd.s32 %s94, 1
      %p98 = scmp.eq.s32.totalorder %s18, 1
      %p99 = scmp.ne.s32.totalorder %s94, %s96
      %p100 = scmp.eq.s32.totalorder %s18, 0
      %p101 = por %p99, %p100
      %p102 = scmp.ne.s32.totalorder %s94, %s96
      %p103 = scmp.eq.s32.totalorder %s23, 1
      %p104 = por %p102, %p103
      %p105 = scmp.ne.s32.totalorder %s96, %s97
      %p106 = scmp.eq.s32.totalorder %s23, 0
      %p107 = por %p105, %p106
      %p108 = scmp.ne.s32.totalorder %s96, %s97
      %p109 = scmp.eq.s32.totalorder %s24, 1
      %p110 = por %p108, %p109
      %p112 = scmp.ne.s32.totalorder %s97, %s111
      %p113 = scmp.eq.s32.totalorder %s24, 0
      %p114 = por %p112, %p113
      %s115 = ssub.s32 %s25, %s37
      %s116 = ssub.s32 %s26, %s33
      %s117 = sor.u32 %s115, %s116
      %p118 = scmp.eq.s32.totalorder %s117, 0
      %s120 = sadd.s32 %s119, 1
      %s121 = scalar_select %p118, %s119, %s120
      %p124 = pneg %p118
      %p125 = scmp.eq.s32.totalorder %s18, 1
      %p126 = por %p124, %p125
      %p127 = scmp.ne.s32.totalorder %s119, %s122
      %p128 = scmp.eq.s32.totalorder %s18, 0
      %p129 = por %p127, %p128
      %p130 = scmp.ne.s32.totalorder %s119, %s122
      %p131 = scmp.eq.s32.totalorder %s23, 1
      %p132 = por %p130, %p131
      %p133 = scmp.ne.s32.totalorder %s122, %s123
      %p134 = scmp.eq.s32.totalorder %s23, 0
      %p135 = por %p133, %p134
      %p136 = scmp.ne.s32.totalorder %s122, %s123
      %p137 = scmp.eq.s32.totalorder %s24, 1
      %p138 = por %p136, %p137
      %p140 = scmp.ne.s32.totalorder %s123, %s139
      %p141 = scmp.eq.s32.totalorder %s24, 0
      %p142 = por %p140, %p141
      %s143 = ssub.s32 %s25, %s37
      %s144 = ssub.s32 %s26, %s33
      %s145 = sor.u32 %s143, %s144
      %p146 = scmp.eq.s32.totalorder %s145, 0
      %s148 = sadd.s32 %s147, 1
      %s149 = scalar_select %p146, %s147, %s148
      %p152 = pneg %p146
      %p153 = scmp.eq.s32.totalorder %s18, 1
      %p154 = por %p152, %p153
      %p155 = scmp.ne.s32.totalorder %s147, %s150
      %p156 = scmp.eq.s32.totalorder %s18, 0
      %p157 = por %p155, %p156
      %p158 = scmp.ne.s32.totalorder %s147, %s150
      %p159 = scmp.eq.s32.totalorder %s23, 1
      %p160 = por %p158, %p159
      %p161 = scmp.ne.s32.totalorder %s150, %s151
      %p162 = scmp.eq.s32.totalorder %s23, 0
      %p163 = por %p161, %p162
      %p164 = scmp.ne.s32.totalorder %s150, %s151
      %p165 = scmp.eq.s32.totalorder %s24, 1
      %p166 = por %p164, %p165
      %p168 = scmp.ne.s32.totalorder %s151, %s167
      %p169 = scmp.eq.s32.totalorder %s24, 0
      %p170 = por %p168, %p169
      %p171 = scmp.le.s32.totalorder 1, %s18
      %p172 = scmp.lt.s32.totalorder %s18, 3
      %p173 = pnand %p171, %p172
      %p174 = pneg %p173
      // Predicated region
      $region9: #{tpu_custom_call.1} parent=5 // pred_check
        _
      $region10: #{tpu_custom_call.1} parent=5 // pred_check_branch
        %176 = sbr.rel (%p173) target = $region12
      $region11: #{tpu_custom_call.1} parent=5 // pred_region
        %s177 = ssub.s32 %s18, 1
        // Predicated region
        $region13: #{tpu_custom_call.1} parent=11 // pred_check
          %p178 = pneg %p107
        $region14: #{tpu_custom_call.1} parent=11 // pred_check_branch
          %180 = sbr.rel (%p178) target = $region16
        $region15: #{tpu_custom_call.1} parent=11 // pred_region
          %s182 = ssub.s32 16, 16
          %183 = vsyncadd [#allocation4], %s182
          %s185 = sshll.u32 %s2, 4
          %s186 = int_to_ptr.vmem [resolvable:$true] %s185
          %188 = dma.vmem_to_smem %s186, 16, [#allocation7], [#allocation4]
        $region16: #{tpu_custom_call.1} parent=11 // pred_fallthru
          _
      $region12: #{tpu_custom_call.1} parent=5 // pred_fallthru
        _
      %p189 = scmp.lt.s32.totalorder %s18, 2
      // Predicated region
      $region17: #{tpu_custom_call.1} parent=5 // pred_check
        %p190 = pneg %p189
      $region18: #{tpu_custom_call.1} parent=5 // pred_check_branch
        %192 = sbr.rel (%p190) target = $region20
      $region19: #{tpu_custom_call.1} parent=5 // pred_region
        // Predicated region
        $region21: #{tpu_custom_call.1} parent=19 // pred_check
          %p193 = pneg %p52
        $region22: #{tpu_custom_call.1} parent=19 // pred_check_branch
          %195 = sbr.rel (%p193) target = $region24
        $region23: #{tpu_custom_call.1} parent=19 // pred_region
          %s196 = sand.u32 %s42, 1
          %s197 = scalar_lea.sflag [#allocation3], %s196
          %s198 = sand.u32 %s42, 1
          %s199 = smul.addr %s198, 10
          %s200 = scalar_lea.vmem [#allocation2], %s199
          %s202 = ssub.s32 160, 160
          %203 = vsyncadd %s197, %s202
          %s204 = smul.addr %s25, 5
          %s205 = sadd.s32 %s26, %s204
          %s206 = smul.addr %s205, 32
          %s207 = scalar_lea.hbm %s0, %s206
          %s208 = sshll.u32 %s200, 4
          %s209 = int_to_ptr.vmem [resolvable:$true] %s208
          %214 = dma.hbm_to_vmem [thread:$0]  %s207, 160, %s209, %s197, 32, 32, 2
        $region24: #{tpu_custom_call.1} parent=19 // pred_fallthru
          _
        // Predicated region
        $region25: #{tpu_custom_call.1} parent=19 // pred_check
          %p215 = pneg %p80
        $region26: #{tpu_custom_call.1} parent=19 // pred_check_branch
          %217 = sbr.rel (%p215) target = $region28
        $region27: #{tpu_custom_call.1} parent=19 // pred_region
          %s218 = sand.u32 %s70, 1
          %s219 = scalar_lea.sflag [#allocation6], %s218
          %s220 = sand.u32 %s70, 1
          %s221 = smul.addr %s220, 2
          %s222 = scalar_lea.vmem [#allocation5], %s221
          %s224 = ssub.s32 32, 32
          %225 = vsyncadd %s219, %s224
          %s226 = sadd.s32 %s26, %s25
          %s227 = smul.addr %s226, 32
          %s228 = scalar_lea.hbm %s1, %s227
          %s230 = sshll.u32 %s222, 4
          %s231 = int_to_ptr.vmem [resolvable:$true] %s230
          %233 = dma.hbm_to_vmem [thread:$0]  %s228, 32, %s231, %s219
        $region28: #{tpu_custom_call.1} parent=19 // pred_fallthru
          _
      $region20: #{tpu_custom_call.1} parent=5 // pred_fallthru
        _
      %p234 = scmp.le.s32.totalorder 1, %s18
      %p235 = scmp.lt.s32.totalorder %s18, 3
      %p236 = pnand %p234, %p235
      %p237 = pneg %p236
      // Predicated region
      $region29: #{tpu_custom_call.1} parent=5 // pred_check
        _
      $region30: #{tpu_custom_call.1} parent=5 // pred_check_branch
        %239 = sbr.rel (%p236) target = $region32
      $region31: #{tpu_custom_call.1} parent=5 // pred_region
        %s240 = ssub.s32 %s18, 1
        %s241 = sand.u32 %s45, 1
        %s242 = scalar_lea.sflag [#allocation3], %s241
        %s243 = sand.u32 %s45, 1
        %s244 = smul.addr %s243, 10
        %s245 = scalar_lea.vmem [#allocation2], %s244
        // Predicated region
        $region33: #{tpu_custom_call.1} parent=31 // pred_check
          %p246 = pneg %p58
        $region34: #{tpu_custom_call.1} parent=31 // pred_check_branch
          %248 = sbr.rel (%p246) target = $region36
        $region35: #{tpu_custom_call.1} parent=31 // pred_region
          %249 = dma.done %s242, 160
        $region36: #{tpu_custom_call.1} parent=31 // pred_fallthru
          _
        %s250 = sand.u32 %s73, 1
        %s251 = scalar_lea.sflag [#allocation6], %s250
        %s252 = sand.u32 %s73, 1
        %s253 = smul.addr %s252, 2
        %s254 = scalar_lea.vmem [#allocation5], %s253
        // Predicated region
        $region37: #{tpu_custom_call.1} parent=31 // pred_check
          %p255 = pneg %p86
        $region38: #{tpu_custom_call.1} parent=31 // pred_check_branch
          %257 = sbr.rel (%p255) target = $region40
        $region39: #{tpu_custom_call.1} parent=31 // pred_region
          %258 = dma.done %s251, 32
        $region40: #{tpu_custom_call.1} parent=31 // pred_fallthru
          _
        // Predicated region
        $region41: #{tpu_custom_call.1} parent=31 // pred_check
          %p259 = pneg %p107
        $region42: #{tpu_custom_call.1} parent=31 // pred_check_branch
          %261 = sbr.rel (%p259) target = $region44
        $region43: #{tpu_custom_call.1} parent=31 // pred_region
          %262 = dma.done [#allocation4], 16
        $region44: #{tpu_custom_call.1} parent=31 // pred_fallthru
          _
        %263 = sfence
        %s264 = sand.u32 %s45, 1
        %s265 = scalar_lea.sflag [#allocation3], %s264
        %s266 = sand.u32 %s45, 1
        %s267 = smul.addr %s266, 10
        %s268 = scalar_lea.vmem [#allocation2], %s267
        %p269 = pneg %p58
        %p270 = pneg %p55
        %s271 = sand.u32 %s73, 1
        %s272 = scalar_lea.sflag [#allocation6], %s271
        %s273 = sand.u32 %s73, 1
        %s274 = smul.addr %s273, 2
        %s275 = scalar_lea.vmem [#allocation5], %s274
        %p276 = pneg %p86
        %p277 = pneg %p83
        %p278 = pneg %p107
        %p279 = pneg %p104
        %p280 = pneg %p135
        %p281 = pneg %p132
        %p282 = scmp.lt.s32.totalorder %s27, 1
        %s283 = scalar_select %p282, %s27, 1
        %p284 = scmp.lt.s32.totalorder %s28, 0
        %s285 = scalar_select %p284, %s28, 0
        %s286 = sadd.s32 %s285, %s283
        %s287 = scalar_lea.vmem %s3, %s286
        %p288 = pneg %p163
        %p289 = pneg %p160
        %p290 = scmp.lt.s32.totalorder %s27, 1
        %s291 = scalar_select %p290, %s27, 1
        %p292 = scmp.lt.s32.totalorder %s28, 0
        %s293 = scalar_select %p292, %s28, 0
        %s294 = sadd.s32 %s293, %s291
        %s295 = scalar_lea.vmem %s4, %s294
        %p296 = scmp.lt.s32.totalorder %s27, 1
        %s297 = scalar_select %p296, %s27, 1
        %p298 = scmp.lt.s32.totalorder %s28, 0
        %s299 = scalar_select %p298, %s28, 0
        %s300 = sadd.s32 %s299, %s297
        %s301 = scalar_lea.vmem %s3, %s300
        %p302 = scmp.lt.s32.totalorder %s27, 1
        %s303 = scalar_select %p302, %s27, 1
        %p304 = scmp.lt.s32.totalorder %s28, 0
        %s305 = scalar_select %p304, %s28, 0
        %s306 = sadd.s32 %s305, %s303
        %s307 = scalar_lea.vmem %s4, %s306
        %v308 = vld [vmem:[%s245] sm:$0x3]
        %v309 = vld [vmem:[%s245 + $0x2] sm:$0x3]
        %v310 = vld [vmem:[%s245 + $0x4] sm:$0x3]
        %v311 = vld [vmem:[%s245 + $0x6] sm:$0x3]
        %v312 = vld [vmem:[%s245 + $0x8] sm:$0x3]
        %v313 = vld [vmem:[%s254] sm:$0x3]
        %vm314 = vcmask 1041408
        %v315 = vsel %vm314, %v308, -inf
        %v316 = vsel %vm314, %v309, -inf
        %v317 = vsel %vm314, %v310, -inf
        %v318 = vsel %vm314, %v311, -inf
        %v319 = vsel %vm314, %v312, -inf
        %v320 = vmax.f32 %v315, %v319
        %v321 = vmax.f32 %v320, %v316
        %v322 = vmax.f32 %v317, %v318
        %v323 = vmax.f32 %v321, %v322
        %v324 = vsub.f32 %v308, %v323
        %v325 = vsub.f32 %v309, %v323
        %v326 = vsub.f32 %v310, %v323
        %v327 = vsub.f32 %v311, %v323
        %v328 = vsub.f32 %v312, %v323
        %v329 = vmul.f32 %v324, 1.442695
        %v330 = vpow.pop %v329
        %v331 = vmul.f32 %v325, 1.442695
        %v332 = vpow.pop %v331
        %v333 = vmul.f32 %v326, 1.442695
        %v334 = vpow.pop %v333
        %v335 = vmul.f32 %v327, 1.442695
        %v336 = vpow.pop %v335
        %v337 = vmul.f32 %v328, 1.442695
        %v338 = vpow.pop %v337
        %v339 = vsel %vm314, %v330, 0.0
        %v340 = vsel %vm314, %v332, 0.0
        %v341 = vadd.f32 %v339, %v340
        %v342 = vsel %vm314, %v334, 0.0
        %v343 = vadd.f32 %v341, %v342
        %v344 = vsel %vm314, %v336, 0.0
        %v345 = vadd.f32 %v343, %v344
        %v346 = vsel %vm314, %v338, 0.0
        %v347 = vadd.f32 %v345, %v346
        %s348 = sld [smem:[#allocation7]]
        %v349 = vstv %s348
        %vm350 = vcmp.eq.s32.totalorder %v313, 1
        %v351 = vsel %vm350, %v332, %v330
        %s352 = sld [smem:[#allocation7 + $0x1]]
        %v353 = vstv %s352
        %v354 = vsel %vm350, %v353, %v349
        %vm355 = vcmp.eq.s32.totalorder %v313, 2
        %v356 = vsel %vm355, %v334, %v351
        %s357 = sld [smem:[#allocation7 + $0x2]]
        %v358 = vstv %s357
        %v359 = vsel %vm355, %v358, %v354
        %vm360 = vcmp.eq.s32.totalorder %v313, 3
        %v361 = vsel %vm360, %v336, %v356
        %s362 = sld [smem:[#allocation7 + $0x3]]
        %v363 = vstv %s362
        %v364 = vsel %vm360, %v363, %v359
        %vm365 = vcmp.eq.s32.totalorder %v313, 4
        %v366 = vsel %vm365, %v338, %v361
        %s367 = sld [smem:[#allocation7 + $0x4]]
        %v368 = vstv %s367
        %v369 = vsel %vm365, %v368, %v364
        %v370 = vrcp.pop %v347
        %v371 = vmul.f32 %v366, %v370
        %v372 = vadd.f32 %v371, 1e-10
        %v373 = vlog2.pop %v372
        %v374 = vmul.f32 %v373, 0.6931472
        %v375 = vsub.f32 1.0, %v372
        %v376 = vmul.f32 %v375, %v375
        %v377 = vsub.f32 0.0, %v376
        %v378 = vmul.f32 %v377, %v374
        %v379 = vsel %vm314, %v378, 0.0
        %380 = vadd.xlane.f32.xlu0 %v379
        %v381 = vpop.xlane.xlu0 %380
        %v382 = vrot.slane %v381, 4
        %v383 = vadd.f32 %v381, %v382
        %v384 = vrot.slane %v383, 2
        %v385 = vadd.f32 %v383, %v384
        %v386 = vrot.slane %v385, 1
        %v387 = vadd.f32 %v385, %v386
        %vm388 = vcmask 0
        %389 = vst.msk [vmem:[%s301] sm:$0x1] %vm388, %v387
        %v390 = vsel %vm314, %v369, 0.0
        %391 = vadd.xlane.f32.xlu0 %v390
        %v392 = vpop.xlane.xlu0 %391
        %v393 = vrot.slane %v392, 4
        %v394 = vadd.f32 %v392, %v393
        %v395 = vrot.slane %v394, 2
        %v396 = vadd.f32 %v394, %v395
        %v397 = vrot.slane %v396, 1
        %v398 = vadd.f32 %v396, %v397
        %399 = vst.msk [vmem:[%s307] sm:$0x1] %vm388, %v398
        %p400 = scmp.lt.s32.totalorder %s27, 1
        %s401 = scalar_select %p400, %s27, 1
        %p402 = scmp.lt.s32.totalorder %s28, 0
        %s403 = scalar_select %p402, %s28, 0
        %s404 = sadd.s32 %s403, %s401
        %s405 = scalar_lea.vmem %s3, %s404
        %p406 = scmp.lt.s32.totalorder %s27, 1
        %s407 = scalar_select %p406, %s27, 1
        %p408 = scmp.lt.s32.totalorder %s28, 0
        %s409 = scalar_select %p408, %s28, 0
        %s410 = sadd.s32 %s409, %s407
        %s411 = scalar_lea.vmem %s4, %s410
        // Predicated region
        $region45: #{tpu_custom_call.1} parent=31 // pred_check
          %p412 = pneg %p132
        $region46: #{tpu_custom_call.1} parent=31 // pred_check_branch
          %414 = sbr.rel (%p412) target = $region48
        $region47: #{tpu_custom_call.1} parent=31 // pred_region
          _
        $region48: #{tpu_custom_call.1} parent=31 // pred_fallthru
          _
        // Predicated region
        $region49: #{tpu_custom_call.1} parent=31 // pred_check
          %p415 = pneg %p160
        $region50: #{tpu_custom_call.1} parent=31 // pred_check_branch
          %417 = sbr.rel (%p415) target = $region52
        $region51: #{tpu_custom_call.1} parent=31 // pred_region
          _
        $region52: #{tpu_custom_call.1} parent=31 // pred_fallthru
          _
      $region32: #{tpu_custom_call.1} parent=5 // pred_fallthru
        _
      %p418 = scmp.le.s32.totalorder 2, %s18
      // Predicated region
      $region53: #{tpu_custom_call.1} parent=5 // pred_check
        %p419 = pneg %p418
      $region54: #{tpu_custom_call.1} parent=5 // pred_check_branch
        %421 = sbr.rel (%p419) target = $region56
      $region55: #{tpu_custom_call.1} parent=5 // pred_region
        %s422 = ssub.s32 %s18, 2
        // Predicated region
        $region57: #{tpu_custom_call.1} parent=55 // pred_check
          %p423 = pneg %p138
        $region58: #{tpu_custom_call.1} parent=55 // pred_check_branch
          %425 = sbr.rel (%p423) target = $region60
        $region59: #{tpu_custom_call.1} parent=55 // pred_region
          %p426 = scmp.lt.s32.totalorder %s29, 1
          %s427 = scalar_select %p426, %s29, 1
          %p428 = scmp.lt.s32.totalorder %s30, 0
          %s429 = scalar_select %p428, %s30, 0
          %s430 = sadd.s32 %s429, %s427
          %s431 = scalar_lea.vmem %s3, %s430
        $region60: #{tpu_custom_call.1} parent=55 // pred_fallthru
          _
        // Predicated region
        $region61: #{tpu_custom_call.1} parent=55 // pred_check
          %p432 = pneg %p166
        $region62: #{tpu_custom_call.1} parent=55 // pred_check_branch
          %434 = sbr.rel (%p432) target = $region64
        $region63: #{tpu_custom_call.1} parent=55 // pred_region
          %p435 = scmp.lt.s32.totalorder %s29, 1
          %s436 = scalar_select %p435, %s29, 1
          %p437 = scmp.lt.s32.totalorder %s30, 0
          %s438 = scalar_select %p437, %s30, 0
          %s439 = sadd.s32 %s438, %s436
          %s440 = scalar_lea.vmem %s4, %s439
        $region64: #{tpu_custom_call.1} parent=55 // pred_fallthru
          _
      $region56: #{tpu_custom_call.1} parent=5 // pred_fallthru
        _
    $region6: #{tpu_custom_call.1} parent=1 // loop_footer
      %s22 = sadd.s32 1, %s18
    $region7: #{tpu_custom_call.1} parent=1 // loop_footer_branch
      %17 = sbr.rel target = $region3
    $region8: #{tpu_custom_call.1} parent=1 // loop_exit
      _
    %441 = vsyncpa [#allocation3], 1
    %s442 = scalar_lea.sflag [#allocation3], 1
    %443 = vsyncpa %s442, 1
    %444 = vsyncpa [#allocation6], 1
    %s445 = scalar_lea.sflag [#allocation6], 1
    %446 = vsyncpa %s445, 1
    %447 = vsyncpa [#allocation4], 1
    %s448 = scalar_lea.sflag [#allocation4], 1
    %449 = vsyncpa %s448, 1

</llo_original>
